<compile_context>
chip_gen: v7x
topology: tpu7x:2x2x1
jax: 0.10.0
libtpu: 0.0.40
codegen_flags: <defaults>
</compile_context>

<pallas_src>
import jax
import jax.numpy as jnp
from jax.experimental import pallas as pl
from jax.experimental.pallas import tpu as pltpu


def _round_up(a, b):
    return ((a + b - 1) // b) * b


def _pick_feature_tile(dim_p, desired):
    """Largest 128-multiple that divides dim_p (itself a 128-multiple) and is <= desired."""
    c = dim_p // 128
    want = max(1, desired // 128)
    best = 1
    for d in range(1, c + 1):
        if c % d == 0 and d <= want:
            best = d
    return best * 128


def parallel_residual_kernel(xb_ref, w_ref, xres_ref, o_ref, acc_ref):
    """One (tm, tn) output tile, accumulated over the K grid axis.

    xb_ref:   (tm, tk) bf16   activation K-slice (matmul operand)
    w_ref:    (tk, tn) bf16   fused-weight tile
    xres_ref: (tm, tn) f32    exact residual slice of x
    o_ref:    (tm, tn)        output tile
    acc_ref:  (tm, tn) f32    VMEM accumulator (persists across k)
    """
    k = pl.program_id(2)

    @pl.when(k == 0)
    def _():
        acc_ref[...] = jnp.zeros_like(acc_ref)

    acc_ref[...] += jnp.dot(xb_ref[...], w_ref[...],
                            preferred_element_type=jnp.float32)

    @pl.when(k == pl.num_programs(2) - 1)
    def _():
        o_ref[...] = (xres_ref[...] + acc_ref[...]).astype(o_ref.dtype)


def parallel_residual(x, w1, w2, *, tm=512, tn=512, tk=512):
    """x: [B, N, D].  w1, w2: [D, D] laid out for x @ W (D_in, D_out)."""
    B, N, D = x.shape
    M = B * N
    out_dtype = x.dtype

    x2 = x.reshape(M, D).astype(jnp.float32)
    # Fuse the two parallel branches into a single weight (free 2x on the hot path).
    w = (w1 + w2).astype(jnp.float32)

    # Pad the feature dim only up to the next 128 multiple (zero padding keeps
    # the contraction exact); no padding at all if D is already lane-aligned.
    Dp = _round_up(D, 128)
    if Dp != D:
        x2 = jnp.pad(x2, ((0, 0), (0, Dp - D)))
        w = jnp.pad(w, ((0, Dp - D), (0, Dp - D)))

    xb = x2.astype(jnp.bfloat16)     # bf16 MXU operand (cast once, not per grid step)
    wb = w.astype(jnp.bfloat16)      # bf16 fused weight
    xres = x2                        # exact f32 residual

    # Feature tiles: 128-multiples that exactly divide Dp (no ragged K blocks).
    tn = _pick_feature_tile(Dp, tn)
    tk = _pick_feature_tile(Dp, tk)
    # M tile: sublane-aligned, shrunk for tiny M; last i-block may be ragged.
    tm = max(8, min(_round_up(M, 8), (tm // 8) * 8))

    grid = (pl.cdiv(M, tm), Dp // tn, Dp // tk)

    # Scoped-VMEM budget from the actual tile footprint (double-buffered
    # inputs/outputs + accumulator scratch), with headroom, capped under
    # v7x's 64 MiB physical VMEM.
    blk_bytes = (2 * (tm * tk * 2)      # xb blocks
                 + 2 * (tk * tn * 2)    # wb blocks
                 + 2 * (tm * tn * 4)    # xres blocks
                 + 2 * (tm * tn * 4)    # out blocks
                 + tm * tn * 4)         # acc scratch
    vmem_limit = int(min(max(blk_bytes + (8 << 20), 32 << 20), 60 << 20))

    flops = 2 * M * Dp * Dp
    bytes_accessed = (M * Dp * 2 * (Dp // tn)      # xb re-streamed per j
                      + Dp * Dp * 2 * grid[0]      # wb re-streamed per i
                      + M * Dp * 4                 # residual read
                      + M * Dp * 4)                # output write

    out = pl.pallas_call(
        parallel_residual_kernel,
        out_shape=jax.ShapeDtypeStruct((M, Dp), out_dtype),
        grid_spec=pltpu.PrefetchScalarGridSpec(
            num_scalar_prefetch=0,
            grid=grid,
            in_specs=[
                # Activation K-slice (bf16): depends on (i, k) only.
                pl.BlockSpec((tm, tk), lambda i, j, k: (i, k)),
                # Fused-weight tile (bf16): depends on (k, j) only.
                pl.BlockSpec((tk, tn), lambda i, j, k: (k, j)),
                # Exact f32 residual tile: depends on (i, j) only (DMA'd once
                # per output tile, not per k step).
                pl.BlockSpec((tm, tn), lambda i, j, k: (i, j)),
            ],
            out_specs=pl.BlockSpec((tm, tn), lambda i, j, k: (i, j)),
            scratch_shapes=[pltpu.VMEM((tm, tn), jnp.float32)],
        ),
        compiler_params=pltpu.CompilerParams(
            # Only the M axis is parallel: splitting j/k across v7x's two
            # TensorCores would duplicate x HBM reads for no weight saving.
            dimension_semantics=("parallel", "arbitrary", "arbitrary"),
            vmem_limit_bytes=vmem_limit,
        ),
        cost_estimate=pl.CostEstimate(flops=flops, transcendentals=0,
                                      bytes_accessed=bytes_accessed),
    )(xb, wb, xres)

    return out[:, :D].reshape(B, N, D)


def parallel_residual_ref(x, w1, w2):
    # Pure-JAX reference mirroring: x + sum(fn(x) for fn in fns)
    return x + jnp.einsum("bnd,de->bne", x, w1) + jnp.einsum("bnd,de->bne", x, w2)


if __name__ == "__main__":
    B, N, D = 2, 8, 32
    key = jax.random.PRNGKey(0)
    kx, k1, k2 = jax.random.split(key, 3)

    x = jax.random.normal(kx, (B, N, D), dtype=jnp.float32)
    # Deterministic "parameters" for the two parallel branches (bias-free
    # Linear(dim, dim)), stored as [D_in, D_out].
    w1 = jax.random.normal(k1, (D, D), dtype=jnp.float32) * (1.0 / D**0.5)
    w2 = jax.random.normal(k2, (D, D), dtype=jnp.float32) * (1.0 / D**0.5)

    out = parallel_residual(x, w1, w2)
    out = jax.block_until_ready(out)

    ref = parallel_residual_ref(x, w1, w2)
    assert out.shape == (B, N, D)
    # bf16 matmul operands (f32 accumulation, exact f32 residual) -> loosened
    # tolerance vs. the f32 reference.
    assert jnp.allclose(out, ref, atol=5e-2, rtol=5e-2)

    print("KERNEL_OK")
</pallas_src>

<mosaic_0001>
module attributes {stable_mosaic.version = 11 : i64} {
  func.func @parallel_residual_kernel(%arg0: i32, %arg1: i32, %arg2: i32, %arg3: memref<16x128xbf16, #tpu.memory_space<vmem>>, %arg4: memref<128x128xbf16, #tpu.memory_space<vmem>>, %arg5: memref<16x128xf32, #tpu.memory_space<vmem>>, %arg6: memref<16x128xf32, #tpu.memory_space<vmem>>, %arg7: memref<16x128xf32, #tpu.memory_space<vmem>>) attributes {dimension_semantics = [#tpu.dimension_semantics<parallel>, #tpu.dimension_semantics<arbitrary>, #tpu.dimension_semantics<arbitrary>], iteration_bounds = array<i64: 1, 1, 1>, scalar_prefetch = 0 : i64, scratch_operands = 1 : i64, tpu.core_type = #tpu.core_type<tc>, window_params = [{transform_indices = @transform_0, window_bounds = array<i64: 16, 128>}, {transform_indices = @transform_1, window_bounds = array<i64: 128, 128>}, {transform_indices = @transform_2, window_bounds = array<i64: 16, 128>}, {transform_indices = @transform_3, window_bounds = array<i64: 16, 128>}]} {
    %c0_i32 = arith.constant 0 : i32
    %0 = arith.cmpi eq, %arg2, %c0_i32 : i32
    %1 = arith.extui %0 : i1 to i32
    %c0_i32_0 = arith.constant 0 : i32
    %2 = arith.cmpi ne, %1, %c0_i32_0 : i32
    scf.if %2 {
      %cst_10 = arith.constant 0.000000e+00 : f32
      %12 = vector.broadcast %cst_10 : f32 to vector<16x128xf32>
      %c0_11 = arith.constant 0 : index
      %c0_12 = arith.constant 0 : index
      %13 = vector.load %arg7[%c0_11, %c0_12] : memref<16x128xf32, #tpu.memory_space<vmem>>, vector<16x128xf32>
      tpu.vector_store %arg7[%c0_11, %c0_12], %12 {strides = array<i32>} : memref<16x128xf32, #tpu.memory_space<vmem>>, vector<16x128xf32>,
    } else {
    }
    %c0 = arith.constant 0 : index
    %c0_1 = arith.constant 0 : index
    %3 = vector.load %arg7[%c0, %c0_1] : memref<16x128xf32, #tpu.memory_space<vmem>>, vector<16x128xf32>
    %c0_2 = arith.constant 0 : index
    %c0_3 = arith.constant 0 : index
    %4 = vector.load %arg3[%c0_2, %c0_3] : memref<16x128xbf16, #tpu.memory_space<vmem>>, vector<16x128xbf16>
    %c0_4 = arith.constant 0 : index
    %c0_5 = arith.constant 0 : index
    %5 = vector.load %arg4[%c0_4, %c0_5] : memref<128x128xbf16, #tpu.memory_space<vmem>>, vector<128x128xbf16>
    %cst = arith.constant dense<0.000000e+00> : vector<16x128xf32>
    %6 = tpu.matmul %4, %5, %cst {dimension_numbers = #tpu.dot_dimension_numbers<[1], [0], [0], [1], [0, 0, 1, 1], [], []>} : vector<16x128xbf16>, vector<128x128xbf16>, vector<16x128xf32> -> vector<16x128xf32>
    %7 = arith.addf %3, %6 : vector<16x128xf32>
    %c0_6 = arith.constant 0 : index
    %c0_7 = arith.constant 0 : index
    %8 = vector.load %arg7[%c0_6, %c0_7] : memref<16x128xf32, #tpu.memory_space<vmem>>, vector<16x128xf32>
    tpu.vector_store %arg7[%c0_6, %c0_7], %7 {strides = array<i32>} : memref<16x128xf32, #tpu.memory_space<vmem>>, vector<16x128xf32>,
    %c0_i32_8 = arith.constant 0 : i32
    %9 = arith.cmpi eq, %arg2, %c0_i32_8 : i32
    %10 = arith.extui %9 : i1 to i32
    %c0_i32_9 = arith.constant 0 : i32
    %11 = arith.cmpi ne, %10, %c0_i32_9 : i32
    scf.if %11 {
      %c0_10 = arith.constant 0 : index
      %c0_11 = arith.constant 0 : index
      %12 = vector.load %arg5[%c0_10, %c0_11] : memref<16x128xf32, #tpu.memory_space<vmem>>, vector<16x128xf32>
      %c0_12 = arith.constant 0 : index
      %c0_13 = arith.constant 0 : index
      %13 = vector.load %arg7[%c0_12, %c0_13] : memref<16x128xf32, #tpu.memory_space<vmem>>, vector<16x128xf32>
      %14 = arith.addf %12, %13 : vector<16x128xf32>
      %c0_14 = arith.constant 0 : index
      %c0_15 = arith.constant 0 : index
      %15 = vector.load %arg6[%c0_14, %c0_15] : memref<16x128xf32, #tpu.memory_space<vmem>>, vector<16x128xf32>
      tpu.vector_store %arg6[%c0_14, %c0_15], %14 {strides = array<i32>} : memref<16x128xf32, #tpu.memory_space<vmem>>, vector<16x128xf32>,
    } else {
    }
    return
  }
  func.func @transform_0(%arg0: i32, %arg1: i32, %arg2: i32) -> (i32, i32) {
    %c0_i32 = arith.constant 0 : i32
    return %arg0, %arg2 : i32, i32
  }
  func.func @transform_1(%arg0: i32, %arg1: i32, %arg2: i32) -> (i32, i32) {
    %c0_i32 = arith.constant 0 : i32
    return %arg2, %arg1 : i32, i32
  }
  func.func @transform_2(%arg0: i32, %arg1: i32, %arg2: i32) -> (i32, i32) {
    %c0_i32 = arith.constant 0 : i32
    return %arg0, %arg1 : i32, i32
  }
  func.func @transform_3(%arg0: i32, %arg1: i32, %arg2: i32) -> (i32, i32) {
    %c0_i32 = arith.constant 0 : i32
    return %arg0, %arg1 : i32, i32
  }
}

</mosaic_0001>

<llo_original>
// kernel: tpu_custom_call.1
$region0: #{tpu_custom_call.1}
  #allocation0 [shape = 'u32[]', space=smem, size = 0x4, offset = 0x4, fixed_abs, tag = 'smem constant byte address 0x4 - core index']
  #allocation1 [shape = 'u32[144,128]{1,0:T(1,128)}', space=vmem, size = 0x12000, scoped, tag = 'internal scratch']
  #allocation2 [shape = 'f32[16,128]{1,0:T(8,128)}', space=vmem, size = 0x2000, scoped, tag = 'scratch operand']
  %s0 = inlined_call_operand.hbm [shape: bf16[16,128], index: 0, kind: input, shape index: {}]
  %s1 = inlined_call_operand.hbm [shape: bf16[128,128], index: 1, kind: input, shape index: {}]
  %s2 = inlined_call_operand.hbm [shape: f32[16,128], index: 2, kind: input, shape index: {}]
  %s3 = inlined_call_operand.hbm [shape: f32[16,128], index: 3, kind: output, shape index: {}]
  %s4 = sld [smem:[#allocation0]]
  $region42: #{tpu_custom_call.1} parent=0
    _
  %s6 = ssub.s32 1, %s4
  %s7 = scalar_select 0, %s6, %s4
  $region1: #{tpu_custom_call.1} parent=0
    #allocation3 [shape = 'u8[4096]{0}', space=vmem, size = 0x1000, scoped, tag = 'input window, operand 0, single buffered']
    #allocation4 [shape = 's32[1]{0}', space=sflag, size = 0x4, scoped, tag = 'scoped memory for tpu_custom_call.1']
    #allocation5 [shape = 's32[1]{0}', space=sflag, size = 0x4, scoped, tag = 'scoped memory for tpu_custom_call.1']
    #allocation6 [shape = 'u8[32768]{0}', space=vmem, size = 0x8000, scoped, tag = 'input window, operand 1, single buffered']
    #allocation7 [shape = 's32[1]{0}', space=sflag, size = 0x4, scoped, tag = 'scoped memory for tpu_custom_call.1']
    #allocation8 [shape = 'u8[8192]{0}', space=vmem, size = 0x2000, scoped, tag = 'input window, operand 2, single buffered']
    #allocation9 [shape = 'u8[8192]{0}', space=vmem, size = 0x2000, scoped, tag = 'output window, operand 0, single buffered']
    %8 = vsyncpa [#allocation4], 0
    %9 = vsyncpa [#allocation7], 0
    %10 = vsyncpa [#allocation5], 0
    // Predicated region
    $region2: #{tpu_custom_call.1} parent=1 // pred_check
      _
    $region3: #{tpu_custom_call.1} parent=1 // pred_check_branch
      %12 = sbr.rel (0) target = $region5
    $region4: #{tpu_custom_call.1} parent=1 // pred_region
      %s14 = ssub.s32 128, 128
      %15 = vsyncadd [#allocation4], %s14
      %s16 = sshll.u32 [#allocation3], 4
      %s17 = int_to_ptr.vmem [resolvable:$true] %s16
      %22 = dma.hbm_to_vmem [thread:$0]  %s0, 128, %s17, [#allocation4], 64, 64, 4
    $region5: #{tpu_custom_call.1} parent=1 // pred_fallthru
      _
    // Predicated region
    $region6: #{tpu_custom_call.1} parent=1 // pred_check
      _
    $region7: #{tpu_custom_call.1} parent=1 // pred_check_branch
      %24 = sbr.rel (0) target = $region9
    $region8: #{tpu_custom_call.1} parent=1 // pred_region
      %s26 = ssub.s32 1024, 1024
      %27 = vsyncadd [#allocation7], %s26
      %s28 = sshll.u32 [#allocation6], 4
      %s29 = int_to_ptr.vmem [resolvable:$true] %s28
      %34 = dma.hbm_to_vmem [thread:$0]  %s1, 1024, %s29, [#allocation7], 64, 64, 4
    $region9: #{tpu_custom_call.1} parent=1 // pred_fallthru
      _
    // Predicated region
    $region10: #{tpu_custom_call.1} parent=1 // pred_check
      _
    $region11: #{tpu_custom_call.1} parent=1 // pred_check_branch
      %36 = sbr.rel (0) target = $region13
    $region12: #{tpu_custom_call.1} parent=1 // pred_region
      %s38 = ssub.s32 256, 256
      %39 = vsyncadd [#allocation7], %s38
      %s40 = sshll.u32 [#allocation8], 4
      %s41 = int_to_ptr.vmem [resolvable:$true] %s40
      %46 = dma.hbm_to_vmem [thread:$0]  %s2, 256, %s41, [#allocation7], 128, 128, 8
    $region13: #{tpu_custom_call.1} parent=1 // pred_fallthru
      _
    // Predicated region
    $region14: #{tpu_custom_call.1} parent=1 // pred_check
      _
    $region15: #{tpu_custom_call.1} parent=1 // pred_check_branch
      %48 = sbr.rel (0) target = $region17
    $region16: #{tpu_custom_call.1} parent=1 // pred_region
      %49 = dma.done [#allocation4], 128
    $region17: #{tpu_custom_call.1} parent=1 // pred_fallthru
      _
    // Predicated region
    $region18: #{tpu_custom_call.1} parent=1 // pred_check
      _
    $region19: #{tpu_custom_call.1} parent=1 // pred_check_branch
      %51 = sbr.rel (0) target = $region21
    $region20: #{tpu_custom_call.1} parent=1 // pred_region
      %52 = dma.done [#allocation7], 1024
    $region21: #{tpu_custom_call.1} parent=1 // pred_fallthru
      _
    // Predicated region
    $region22: #{tpu_custom_call.1} parent=1 // pred_check
      _
    $region23: #{tpu_custom_call.1} parent=1 // pred_check_branch
      %54 = sbr.rel (0) target = $region25
    $region24: #{tpu_custom_call.1} parent=1 // pred_region
      %55 = dma.done [#allocation7], 256
    $region25: #{tpu_custom_call.1} parent=1 // pred_fallthru
      _
    %p57 = scmp.eq.s32.totalorder 0, 0
    // Predicated region
    $region26: #{tpu_custom_call.1} parent=1 // pred_check
      %p58 = pneg %p57
    $region27: #{tpu_custom_call.1} parent=1 // pred_check_branch
      %60 = sbr.rel (%p58) target = $region29
    $region28: #{tpu_custom_call.1} parent=1 // pred_region
      %61 = vst [vmem:[#allocation2] sm:$0xff] 0.0
      %62 = vst [vmem:[#allocation2 + $0x8] sm:$0xff] 0.0
    $region29: #{tpu_custom_call.1} parent=1 // pred_fallthru
      _
    %v63 = vld [vmem:[#allocation2] sm:$0xff]
    %v64 = vld [vmem:[#allocation2 + $0x8] sm:$0xff]
    %v65 = vld [vmem:[#allocation3] sm:$0xf]
    %v66 = vld [vmem:[#allocation3 + $0x4] sm:$0xf]
    %v67 = vld [vmem:[#allocation6] sm:$0xf]
    %v68 = vld [vmem:[#allocation6 + $0x4] sm:$0xf]
    %v69 = vld [vmem:[#allocation6 + $0x8] sm:$0xf]
    %v70 = vld [vmem:[#allocation6 + $0xc] sm:$0xf]
    %v71 = vld [vmem:[#allocation6 + $0x10] sm:$0xf]
    %v72 = vld [vmem:[#allocation6 + $0x14] sm:$0xf]
    %v73 = vld [vmem:[#allocation6 + $0x18] sm:$0xf]
    %v74 = vld [vmem:[#allocation6 + $0x1c] sm:$0xf]
    %v75 = vld [vmem:[#allocation6 + $0x20] sm:$0xf]
    %v76 = vld [vmem:[#allocation6 + $0x24] sm:$0xf]
    %v77 = vld [vmem:[#allocation6 + $0x28] sm:$0xf]
    %v78 = vld [vmem:[#allocation6 + $0x2c] sm:$0xf]
    %v79 = vld [vmem:[#allocation6 + $0x30] sm:$0xf]
    %v80 = vld [vmem:[#allocation6 + $0x34] sm:$0xf]
    %v81 = vld [vmem:[#allocation6 + $0x38] sm:$0xf]
    %v82 = vld [vmem:[#allocation6 + $0x3c] sm:$0xf]
    %v85 = vunpack.c.l.b16 %v65
    %v86 = vunpack.c.l.b16 %v66
    %v87 = vpack.c.b16 %v86, %v85
    %v105 = vunpack.c.l.b16 %v67
    %v106 = vunpack.c.l.b16 %v68
    %v107 = vunpack.c.l.b16 %v69
    %v108 = vunpack.c.l.b16 %v70
    %v109 = vunpack.c.l.b16 %v71
    %v110 = vunpack.c.l.b16 %v72
    %v111 = vunpack.c.l.b16 %v73
    %v112 = vunpack.c.l.b16 %v74
    %v113 = vunpack.c.l.b16 %v75
    %v114 = vunpack.c.l.b16 %v76
    %v115 = vunpack.c.l.b16 %v77
    %v116 = vunpack.c.l.b16 %v78
    %v117 = vunpack.c.l.b16 %v79
    %v118 = vunpack.c.l.b16 %v80
    %v119 = vunpack.c.l.b16 %v81
    %v120 = vunpack.c.l.b16 %v82
    %v121 = vpack.c.b16 %v106, %v105
    %v122 = vpack.c.b16 %v108, %v107
    %v123 = vpack.c.b16 %v110, %v109
    %v124 = vpack.c.b16 %v112, %v111
    %v125 = vpack.c.b16 %v114, %v113
    %v126 = vpack.c.b16 %v116, %v115
    %v127 = vpack.c.b16 %v118, %v117
    %v128 = vpack.c.b16 %v120, %v119
    %137 = vmatprep.subr.bf16.mxu0 0
    %138 = vmatpush1.bf16.msra.mxu0 %v121
    %139 = vmatprep.subr.bf16.mxu0 0
    %140 = vmatpush1.bf16.msra.mxu0 %v122
    %141 = vmatprep.subr.bf16.mxu0 0
    %142 = vmatpush1.bf16.msra.mxu0 %v123
    %143 = vmatprep.subr.bf16.mxu0 0
    %144 = vmatpush1.bf16.msra.mxu0 %v124
    %145 = vmatprep.subr.bf16.mxu0 0
    %146 = vmatpush1.bf16.msra.mxu0 %v125
    %147 = vmatprep.subr.bf16.mxu0 0
    %148 = vmatpush1.bf16.msra.mxu0 %v126
    %149 = vmatprep.subr.bf16.mxu0 0
    %150 = vmatpush1.bf16.msra.mxu0 %v127
    %151 = vmatprep.subr.bf16.mxu0 0
    %152 = vmatpush1.bf16.msra.mxu0 %v128
    %153 = vmatprep.subr.bf16.mxu0 0
    %154 = vmatpush1.bf16.msra.mxu0 0
    %155 = vmatprep.subr.bf16.mxu0 0
    %156 = vmatpush1.bf16.msra.mxu0 0
    %157 = vmatprep.subr.bf16.mxu0 0
    %158 = vmatpush1.bf16.msra.mxu0 0
    %159 = vmatprep.subr.bf16.mxu0 0
    %160 = vmatpush1.bf16.msra.mxu0 0
    %161 = vmatprep.subr.bf16.mxu0 0
    %162 = vmatpush1.bf16.msra.mxu0 0
    %163 = vmatprep.subr.bf16.mxu0 0
    %164 = vmatpush1.bf16.msra.mxu0 0
    %165 = vmatprep.subr.bf16.mxu0 0
    %166 = vmatpush1.bf16.msra.mxu0 0
    %167 = vmatprep.subr.bf16.mxu0 0
    %168 = vmatpush1.bf16.msra.mxu0 0
    %169 = vmatprep.mubr.bf16.mxu0 0
    %170 = vmatmul.mubr.bf16.gmra.mrb[0].mxu0 %v87
    %v171 = vpop.f32.mrb[0].mxu0
    %v172 = vadd.f32 0.0, %v171
    %v173 = vpop.f32.mrb[0].mxu0
    %v174 = vpop.f32.mrb[0].mxu0
    %v175 = vadd.f32 0.0, %v174
    %v176 = vpop.f32.mrb[0].mxu0
    %177 = vdwg.mxu0
    %v178 = vadd.f32 %v63, %v172
    %v179 = vadd.f32 %v64, %v175
    %180 = vst [vmem:[#allocation2] sm:$0xff] %v178
    %181 = vst [vmem:[#allocation2 + $0x8] sm:$0xff] %v179
    // Predicated region
    $region30: #{tpu_custom_call.1} parent=1 // pred_check
      %p182 = pneg %p57
    $region31: #{tpu_custom_call.1} parent=1 // pred_check_branch
      %184 = sbr.rel (%p182) target = $region33
    $region32: #{tpu_custom_call.1} parent=1 // pred_region
      %v185 = vld [vmem:[#allocation8] sm:$0xff]
      %v186 = vld [vmem:[#allocation8 + $0x8] sm:$0xff]
      %v187 = vld [vmem:[#allocation2] sm:$0xff]
      %v188 = vld [vmem:[#allocation2 + $0x8] sm:$0xff]
      %v189 = vadd.f32 %v185, %v187
      %v190 = vadd.f32 %v186, %v188
      %191 = vst [vmem:[#allocation9] sm:$0xff] %v189
      %192 = vst [vmem:[#allocation9 + $0x8] sm:$0xff] %v190
    $region33: #{tpu_custom_call.1} parent=1 // pred_fallthru
      _
    // Predicated region
    $region34: #{tpu_custom_call.1} parent=1 // pred_check
      _
    $region35: #{tpu_custom_call.1} parent=1 // pred_check_branch
      %194 = sbr.rel (0) target = $region37
    $region36: #{tpu_custom_call.1} parent=1 // pred_region
      %s196 = ssub.s32 256, 256
      %197 = vsyncadd [#allocation5], %s196
      %s198 = sshll.u32 [#allocation9], 4
      %s199 = int_to_ptr.vmem [resolvable:$true] %s198
      %204 = dma.vmem_to_hbm [thread:$0]  %s199, 256, %s3, [#allocation5], 128, 128, 8
    $region37: #{tpu_custom_call.1} parent=1 // pred_fallthru
      _
    // Predicated region
    $region38: #{tpu_custom_call.1} parent=1 // pred_check
      _
    $region39: #{tpu_custom_call.1} parent=1 // pred_check_branch
      %206 = sbr.rel (0) target = $region41
    $region40: #{tpu_custom_call.1} parent=1 // pred_region
      %207 = dma.done [#allocation5], 256
    $region41: #{tpu_custom_call.1} parent=1 // pred_fallthru
      _
    %208 = vsyncpa [#allocation4], 1
    %209 = vsyncpa [#allocation7], 1
    %210 = vsyncpa [#allocation5], 1

</llo_original>
